<compile_context>
chip_gen: v6e
topology: v6e:2x2x1
jax: 0.10.0
libtpu: 0.0.40
codegen_flags: <defaults>
</compile_context>

<pallas_src>
import functools

import jax
import jax.numpy as jnp
from jax import lax
from jax.experimental import pallas as pl
from jax.experimental.pallas import tpu as pltpu


def _round_up(x, m):
    return ((x + m - 1) // m) * m


def _default_vmem_limit():
    cap = 64 * 1024 * 1024          # safe fallback (v7x per-TC VMEM)
    try:
        cap = int(pltpu.get_tpu_info().vmem_capacity_bytes)
    except Exception:
        pass
    return max(32 * 1024 * 1024, min(int(cap * 0.8), 112 * 1024 * 1024))


def _shifted_ce_kernel(h_ref, w_ref, lbl_ref, lw_ref, part_ref,
                       m_sc, l_sc, ll_sc, *, vocab, vpad, tile_v):
    """One (row-tile, vocab-strip) step of the online-LSE cross-entropy.

    h_ref   : (1, TILE_S, D)   bf16  hidden states for this row tile
    w_ref   : (D, TILE_V)      bf16  LM-head weight strip (vocab block k)
    lbl_ref : (1, TILE_S, 1)   i32   shifted labels (input_ids[..., 1:])
    lw_ref  : (1, TILE_S, 1)   f32   shifted loss weights (loss_masks[..., 1:])
    part_ref: (1, 1, 8, 128)   f32   lane 0 = weighted loss sum, lane 1 = weight sum
    m_sc / l_sc / ll_sc: (TILE_S, 1) f32 running max / sum-exp / label-logit
    """
    k = pl.program_id(2)
    nk = pl.num_programs(2)

    @pl.when(k == 0)
    def _():
        m_sc[...] = jnp.full_like(m_sc, -jnp.inf)
        l_sc[...] = jnp.zeros_like(l_sc)
        ll_sc[...] = jnp.zeros_like(ll_sc)

    # bf16 MXU matmul with f32 accumulation for this vocab strip.
    logits = jnp.dot(h_ref[0], w_ref[...],
                     preferred_element_type=jnp.float32)          # (TILE_S, TILE_V)

    # Global class indices of this strip (also used for label extraction).
    cls = k * tile_v + lax.broadcasted_iota(jnp.int32, logits.shape, 1)
    if vpad != vocab:
        # Only needed when the vocab is lane-padded; logits stay f32 so -1e30
        # never overflows.  Static gate: no VPU cost when vpad == vocab.
        logits = jnp.where(cls < vocab, logits, -1e30)

    lbl = lbl_ref[0]                                               # (TILE_S, 1) i32

    # Online (streaming) log-sum-exp update + fused label-logit extraction.
    m_prev = m_sc[...]
    m_new = jnp.maximum(m_prev, jnp.max(logits, axis=-1, keepdims=True))
    l_sc[...] = (l_sc[...] * jnp.exp(m_prev - m_new)
                 + jnp.sum(jnp.exp(logits - m_new), axis=-1, keepdims=True))
    ll_sc[...] = ll_sc[...] + jnp.sum(jnp.where(cls == lbl, logits, 0.0),
                                      axis=-1, keepdims=True)
    m_sc[...] = m_new

    @pl.when(k == nk - 1)
    def _():
        lw = lw_ref[0]                                             # (TILE_S, 1) f32
        ce = (m_sc[...] + jnp.log(l_sc[...])) - ll_sc[...]         # per-token NLL
        # where() (not plain multiply) so NaN/inf from padded/garbage rows
        # (lw == 0) never reach the tile sum.
        loss_sum = jnp.sum(jnp.where(lw != 0.0, ce * lw, 0.0))
        w_sum = jnp.sum(lw)
        lane = lax.broadcasted_iota(jnp.int32, part_ref.shape, 3)
        part_ref[...] = jnp.where(lane == 0, loss_sum,
                                  jnp.where(lane == 1, w_sum, 0.0))


def concat_model_forward(input_ids, attention_masks, loss_masks, params, *,
                         tile_s=256, tile_v=512, vmem_limit_bytes=None):
    """Returns (loss, n_loss) exactly as ConcatModel.forward.

    VMEM per step ≈ 2·TILE_S·D·2B + 2·D·TILE_V·2B + TILE_S·TILE_V·4B + small;
    the defaults (256, 512) fit comfortably in v7x's 64 MiB even for D=4096,
    and larger tiles can be passed on v5e/v6e (128 MiB).
    """
    emb = params["emb"]        # (vocab, D)  bf16
    w = params["w"]            # (D, VPAD)   bf16, padded vocab columns are zero
    vocab = int(params["vocab"])

    bz, seqlen = input_ids.shape
    d = emb.shape[1]
    vpad = w.shape[1]

    # "backbone" -> last_hidden_state (bf16 HBM intermediate); stays (B, S, D),
    # the logits/labels shift is folded into the tiny label/weight columns.
    hidden = emb[input_ids]                                   # (B, S, D) bf16
    del attention_masks  # consumed only by the real transformer backbone

    # Tile sizing: row tile multiple of 8 sublanes, vocab tile a multiple of
    # 128 lanes that divides VPAD (so no ragged vocab strips ever pollute LSE).
    tile_s = max(8, (min(tile_s, _round_up(seqlen, 8)) // 8) * 8)
    tile_v = max(128, (min(tile_v, vpad) // 128) * 128)
    while vpad % tile_v != 0:
        tile_v -= 128

    s_tiles = pl.cdiv(max(seqlen - 1, 1), tile_s)   # position S-1 has no label
    v_tiles = vpad // tile_v
    s_pad = s_tiles * tile_s

    # Shifted labels / loss weights, padded with zero-weight rows.  Rows past
    # the valid range (including any ragged hidden rows) carry lw == 0.
    labels = jnp.pad(input_ids[:, 1:].astype(jnp.int32), ((0, 0), (0, 1)))
    lw = jnp.pad(loss_masks[:, 1:].astype(jnp.float32), ((0, 0), (0, 1)))
    if s_pad > seqlen:
        labels = jnp.pad(labels, ((0, 0), (0, s_pad - seqlen)))
        lw = jnp.pad(lw, ((0, 0), (0, s_pad - seqlen)))
    elif s_pad < seqlen:
        labels = labels[:, :s_pad]
        lw = lw[:, :s_pad]
    labels = labels.reshape(bz, s_pad, 1)
    lw = lw.reshape(bz, s_pad, 1)

    kernel = functools.partial(_shifted_ce_kernel,
                               vocab=vocab, vpad=vpad, tile_v=tile_v)

    grid_spec = pltpu.PrefetchScalarGridSpec(
        num_scalar_prefetch=0,
        grid=(bz, s_tiles, v_tiles),                  # vocab reduction innermost
        in_specs=[
            pl.BlockSpec((1, tile_s, d), lambda b, i, k: (b, i, 0)),   # hidden rows
            pl.BlockSpec((d, tile_v), lambda b, i, k: (0, k)),         # weight strip
            pl.BlockSpec((1, tile_s, 1), lambda b, i, k: (b, i, 0)),   # labels
            pl.BlockSpec((1, tile_s, 1), lambda b, i, k: (b, i, 0)),   # loss weights
        ],
        out_specs=pl.BlockSpec((1, 1, 8, 128), lambda b, i, k: (b, i, 0, 0)),
        scratch_shapes=[
            pltpu.VMEM((tile_s, 1), jnp.float32),     # running max
            pltpu.VMEM((tile_s, 1), jnp.float32),     # running sum-exp
            pltpu.VMEM((tile_s, 1), jnp.float32),     # label logit accumulator
        ],
    )

    if vmem_limit_bytes is None:
        vmem_limit_bytes = _default_vmem_limit()

    cost = pl.CostEstimate(
        flops=2 * bz * s_pad * d * vpad,
        transcendentals=bz * s_pad * vpad,
        bytes_accessed=(bz * s_pad * d * 2                # hidden stream
                        + bz * s_tiles * d * vpad * 2     # weight strips (re-read per row tile)
                        + 2 * bz * s_pad * 4              # labels + loss weights
                        + bz * s_tiles * 8 * 128 * 4),    # lane-dense partials
    )

    partials = pl.pallas_call(
        kernel,
        out_shape=jax.ShapeDtypeStruct((bz, s_tiles, 8, 128), jnp.float32),
        grid_spec=grid_spec,
        compiler_params=pltpu.CompilerParams(
            dimension_semantics=("parallel", "parallel", "arbitrary"),
            vmem_limit_bytes=vmem_limit_bytes,
        ),
        cost_estimate=cost,
    )(hidden, w, labels, lw)

    loss_total = jnp.sum(partials[..., 0, 0])
    n_loss = jnp.sum(partials[..., 0, 1])
    loss = loss_total / n_loss       # NaN if loss mask all-zero (matches torch)
    return loss, n_loss


def make_params(key, vocab, hidden):
    vpad = _round_up(vocab, 128)
    k_emb, k_w = jax.random.split(key)
    emb = (jax.random.normal(k_emb, (vocab, hidden), jnp.float32) * 0.02
           ).astype(jnp.bfloat16)
    w_real = jax.random.normal(k_w, (hidden, vocab), jnp.float32) * 0.02
    w = jnp.zeros((hidden, vpad), jnp.float32).at[:, :vocab].set(
        w_real).astype(jnp.bfloat16)
    return {"emb": emb, "w": w, "vocab": vocab}


def _reference(input_ids, attention_masks, loss_masks, params):
    """Plain-JAX reference mirroring ConcatModel.forward."""
    emb, w, vocab = params["emb"], params["w"], int(params["vocab"])
    h = emb[input_ids].astype(jnp.float32)                       # (B, S, D)
    logits = h @ w.astype(jnp.float32)[:, :vocab]                # (B, S, V)
    shift_logits = logits[:, :-1, :].reshape(-1, vocab)
    shift_labels = input_ids[:, 1:].reshape(-1)
    shift_masks = loss_masks[:, 1:].reshape(-1).astype(jnp.float32)
    lse = jax.nn.logsumexp(shift_logits, axis=-1)
    nll = lse - shift_logits[jnp.arange(shift_logits.shape[0]), shift_labels]
    n_loss = shift_masks.sum()
    loss = (nll * shift_masks).sum() / n_loss
    return loss, n_loss


if __name__ == "__main__":
    BZ, SEQ, HIDDEN, VOCAB = 2, 128, 128, 500   # VOCAB not a multiple of 128 -> exercises padding
    TILE_S, TILE_V = 64, 128                    # multi-step grid: (2 batches, 2 row tiles, 4 vocab strips)

    key = jax.random.PRNGKey(0)
    k_par, k_ids = jax.random.split(key)

    params = make_params(k_par, VOCAB, HIDDEN)

    input_ids = jax.random.randint(k_ids, (BZ, SEQ), 0, VOCAB, jnp.int32)
    attention_masks = jnp.ones((BZ, SEQ), jnp.int32).at[:, SEQ - 8:].set(0)
    # loss mask: zero on a short "prompt" prefix, 0.5-weighted middle region,
    # zero on the padded tail (exercises non-binary float loss weights).
    loss_masks = (jnp.ones((BZ, SEQ), jnp.float32)
                  .at[:, :4].set(0.0)
                  .at[:, 4:16].set(0.5)
                  .at[:, SEQ - 8:].set(0.0))

    loss, n_loss = concat_model_forward(
        input_ids, attention_masks, loss_masks, params,
        tile_s=TILE_S, tile_v=TILE_V)
    jax.block_until_ready((loss, n_loss))

    ref_loss, ref_n = _reference(input_ids, attention_masks, loss_masks, params)
    assert jnp.allclose(loss, ref_loss, rtol=2e-3, atol=2e-3), (loss, ref_loss)
    assert jnp.allclose(n_loss, ref_n, rtol=1e-6, atol=1e-6), (n_loss, ref_n)

    print("KERNEL_OK")
</pallas_src>

<mosaic_0001>
module attributes {stable_mosaic.version = 11 : i64} {
  func.func @_shifted_ce_kernel(%arg0: i32, %arg1: i32, %arg2: i32, %arg3: memref<1x64x128xbf16, #tpu.memory_space<vmem>>, %arg4: memref<128x128xbf16, #tpu.memory_space<vmem>>, %arg5: memref<1x64x1xi32, #tpu.memory_space<vmem>>, %arg6: memref<1x64x1xf32, #tpu.memory_space<vmem>>, %arg7: memref<1x1x8x128xf32, #tpu.memory_space<vmem>>, %arg8: memref<64x1xf32, #tpu.memory_space<vmem>>, %arg9: memref<64x1xf32, #tpu.memory_space<vmem>>, %arg10: memref<64x1xf32, #tpu.memory_space<vmem>>) attributes {dimension_semantics = [#tpu.dimension_semantics<parallel>, #tpu.dimension_semantics<parallel>, #tpu.dimension_semantics<arbitrary>], iteration_bounds = array<i64: 2, 2, 4>, scalar_prefetch = 0 : i64, scratch_operands = 3 : i64, tpu.core_type = #tpu.core_type<tc>, window_params = [{transform_indices = @transform_0, window_bounds = array<i64: 1, 64, 128>}, {transform_indices = @transform_1, window_bounds = array<i64: 128, 128>}, {transform_indices = @transform_2, window_bounds = array<i64: 1, 64, 1>}, {transform_indices = @transform_3, window_bounds = array<i64: 1, 64, 1>}, {transform_indices = @transform_4, window_bounds = array<i64: 1, 1, 8, 128>}]} {
    %c0_i32 = arith.constant 0 : i32
    %0 = arith.cmpi eq, %arg2, %c0_i32 : i32
    %1 = arith.extui %0 : i1 to i32
    %c0_i32_0 = arith.constant 0 : i32
    %2 = arith.cmpi ne, %1, %c0_i32_0 : i32
    scf.if %2 {
      %cst_26 = arith.constant 0xFF800000 : f32
      %45 = vector.broadcast %cst_26 : f32 to vector<64x1xf32>
      %c0_27 = arith.constant 0 : index
      %c0_28 = arith.constant 0 : index
      %46 = vector.load %arg8[%c0_27, %c0_28] : memref<64x1xf32, #tpu.memory_space<vmem>>, vector<64x1xf32>
      tpu.vector_store %arg8[%c0_27, %c0_28], %45 {strides = array<i32>} : memref<64x1xf32, #tpu.memory_space<vmem>>, vector<64x1xf32>,
      %cst_29 = arith.constant 0.000000e+00 : f32
      %47 = vector.broadcast %cst_29 : f32 to vector<64x1xf32>
      %c0_30 = arith.constant 0 : index
      %c0_31 = arith.constant 0 : index
      %48 = vector.load %arg9[%c0_30, %c0_31] : memref<64x1xf32, #tpu.memory_space<vmem>>, vector<64x1xf32>
      tpu.vector_store %arg9[%c0_30, %c0_31], %47 {strides = array<i32>} : memref<64x1xf32, #tpu.memory_space<vmem>>, vector<64x1xf32>,
      %cst_32 = arith.constant 0.000000e+00 : f32
      %49 = vector.broadcast %cst_32 : f32 to vector<64x1xf32>
      %c0_33 = arith.constant 0 : index
      %c0_34 = arith.constant 0 : index
      %50 = vector.load %arg10[%c0_33, %c0_34] : memref<64x1xf32, #tpu.memory_space<vmem>>, vector<64x1xf32>
      tpu.vector_store %arg10[%c0_33, %c0_34], %49 {strides = array<i32>} : memref<64x1xf32, #tpu.memory_space<vmem>>, vector<64x1xf32>,
    } else {
    }
    %c0 = arith.constant 0 : index
    %c0_1 = arith.constant 0 : index
    %c0_2 = arith.constant 0 : index
    %3 = vector.load %arg3[%c0, %c0_1, %c0_2] : memref<1x64x128xbf16, #tpu.memory_space<vmem>>, vector<1x64x128xbf16>
    %4 = vector.shape_cast %3 : vector<1x64x128xbf16> to vector<64x128xbf16>
    %c0_3 = arith.constant 0 : index
    %c0_4 = arith.constant 0 : index
    %5 = vector.load %arg4[%c0_3, %c0_4] : memref<128x128xbf16, #tpu.memory_space<vmem>>, vector<128x128xbf16>
    %cst = arith.constant dense<0.000000e+00> : vector<64x128xf32>
    %6 = tpu.matmul %4, %5, %cst {dimension_numbers = #tpu.dot_dimension_numbers<[1], [0], [0], [1], [0, 0, 1, 1], [], []>} : vector<64x128xbf16>, vector<128x128xbf16>, vector<64x128xf32> -> vector<64x128xf32>
    %c128_i32 = arith.constant 128 : i32
    %7 = arith.muli %arg2, %c128_i32 : i32
    %8 = tpu.iota {dimensions = array<i32: 1>} : vector<64x128xi32>
    %9 = vector.broadcast %7 : i32 to vector<64x128xi32>
    %10 = arith.addi %9, %8 : vector<64x128xi32>
    %c500_i32 = arith.constant 500 : i32
    %11 = vector.broadcast %c500_i32 : i32 to vector<64x128xi32>
    %12 = arith.cmpi slt, %10, %11 : vector<64x128xi32>
    %cst_5 = arith.constant -1.000000e+30 : f32
    %13 = vector.broadcast %cst_5 : f32 to vector<64x128xf32>
    %14 = arith.select %12, %6, %13 : vector<64x128xi1>, vector<64x128xf32>
    %c0_6 = arith.constant 0 : index
    %c0_7 = arith.constant 0 : index
    %c0_8 = arith.constant 0 : index
    %15 = vector.load %arg5[%c0_6, %c0_7, %c0_8] : memref<1x64x1xi32, #tpu.memory_space<vmem>>, vector<1x64x1xi32>
    %16 = vector.shape_cast %15 : vector<1x64x1xi32> to vector<64x1xi32>
    %c0_9 = arith.constant 0 : index
    %c0_10 = arith.constant 0 : index
    %17 = vector.load %arg8[%c0_9, %c0_10] : memref<64x1xf32, #tpu.memory_space<vmem>>, vector<64x1xf32>
    %cst_11 = arith.constant dense<0xFF800000> : vector<64xf32>
    %18 = vector.multi_reduction <maximumf>, %14, %cst_11 [1] : vector<64x128xf32> to vector<64xf32>
    %19 = vector.shape_cast %18 : vector<64xf32> to vector<64x1xf32>
    %20 = arith.maximumf %17, %19 : vector<64x1xf32>
    %c0_12 = arith.constant 0 : index
    %c0_13 = arith.constant 0 : index
    %21 = vector.load %arg9[%c0_12, %c0_13] : memref<64x1xf32, #tpu.memory_space<vmem>>, vector<64x1xf32>
    %22 = arith.subf %17, %20 : vector<64x1xf32>
    %23 = math.exp %22 : vector<64x1xf32>
    %24 = arith.mulf %21, %23 : vector<64x1xf32>
    %25 = vector.broadcast %20 : vector<64x1xf32> to vector<64x128xf32>
    %26 = arith.subf %14, %25 : vector<64x128xf32>
    %27 = math.exp %26 : vector<64x128xf32>
    %cst_14 = arith.constant dense<0.000000e+00> : vector<64xf32>
    %28 = vector.multi_reduction <add>, %27, %cst_14 [1] : vector<64x128xf32> to vector<64xf32>
    %29 = vector.shape_cast %28 : vector<64xf32> to vector<64x1xf32>
    %30 = arith.addf %24, %29 : vector<64x1xf32>
    %c0_15 = arith.constant 0 : index
    %c0_16 = arith.constant 0 : index
    %31 = vector.load %arg9[%c0_15, %c0_16] : memref<64x1xf32, #tpu.memory_space<vmem>>, vector<64x1xf32>
    tpu.vector_store %arg9[%c0_15, %c0_16], %30 {strides = array<i32>} : memref<64x1xf32, #tpu.memory_space<vmem>>, vector<64x1xf32>,
    %c0_17 = arith.constant 0 : index
    %c0_18 = arith.constant 0 : index
    %32 = vector.load %arg10[%c0_17, %c0_18] : memref<64x1xf32, #tpu.memory_space<vmem>>, vector<64x1xf32>
    %33 = vector.broadcast %16 : vector<64x1xi32> to vector<64x128xi32>
    %34 = arith.cmpi eq, %10, %33 : vector<64x128xi32>
    %cst_19 = arith.constant 0.000000e+00 : f32
    %35 = vector.broadcast %cst_19 : f32 to vector<64x128xf32>
    %36 = arith.select %34, %14, %35 : vector<64x128xi1>, vector<64x128xf32>
    %cst_20 = arith.constant dense<0.000000e+00> : vector<64xf32>
    %37 = vector.multi_reduction <add>, %36, %cst_20 [1] : vector<64x128xf32> to vector<64xf32>
    %38 = vector.shape_cast %37 : vector<64xf32> to vector<64x1xf32>
    %39 = arith.addf %32, %38 : vector<64x1xf32>
    %c0_21 = arith.constant 0 : index
    %c0_22 = arith.constant 0 : index
    %40 = vector.load %arg10[%c0_21, %c0_22] : memref<64x1xf32, #tpu.memory_space<vmem>>, vector<64x1xf32>
    tpu.vector_store %arg10[%c0_21, %c0_22], %39 {strides = array<i32>} : memref<64x1xf32, #tpu.memory_space<vmem>>, vector<64x1xf32>,
    %c0_23 = arith.constant 0 : index
    %c0_24 = arith.constant 0 : index
    %41 = vector.load %arg8[%c0_23, %c0_24] : memref<64x1xf32, #tpu.memory_space<vmem>>, vector<64x1xf32>
    tpu.vector_store %arg8[%c0_23, %c0_24], %20 {strides = array<i32>} : memref<64x1xf32, #tpu.memory_space<vmem>>, vector<64x1xf32>,
    %c3_i32 = arith.constant 3 : i32
    %42 = arith.cmpi eq, %arg2, %c3_i32 : i32
    %43 = arith.extui %42 : i1 to i32
    %c0_i32_25 = arith.constant 0 : i32
    %44 = arith.cmpi ne, %43, %c0_i32_25 : i32
    scf.if %44 {
      %c0_26 = arith.constant 0 : index
      %c0_27 = arith.constant 0 : index
      %c0_28 = arith.constant 0 : index
      %45 = vector.load %arg6[%c0_26, %c0_27, %c0_28] : memref<1x64x1xf32, #tpu.memory_space<vmem>>, vector<1x64x1xf32>
      %46 = vector.shape_cast %45 : vector<1x64x1xf32> to vector<64x1xf32>
      %c0_29 = arith.constant 0 : index
      %c0_30 = arith.constant 0 : index
      %47 = vector.load %arg8[%c0_29, %c0_30] : memref<64x1xf32, #tpu.memory_space<vmem>>, vector<64x1xf32>
      %c0_31 = arith.constant 0 : index
      %c0_32 = arith.constant 0 : index
      %48 = vector.load %arg9[%c0_31, %c0_32] : memref<64x1xf32, #tpu.memory_space<vmem>>, vector<64x1xf32>
      %49 = math.log %48 : vector<64x1xf32>
      %50 = arith.addf %47, %49 : vector<64x1xf32>
      %c0_33 = arith.constant 0 : index
      %c0_34 = arith.constant 0 : index
      %51 = vector.load %arg10[%c0_33, %c0_34] : memref<64x1xf32, #tpu.memory_space<vmem>>, vector<64x1xf32>
      %52 = arith.subf %50, %51 : vector<64x1xf32>
      %cst_35 = arith.constant 0.000000e+00 : f32
      %53 = vector.broadcast %cst_35 : f32 to vector<64x1xf32>
      %54 = arith.cmpf one, %46, %53 : vector<64x1xf32>
      %55 = arith.mulf %52, %46 : vector<64x1xf32>
      %cst_36 = arith.constant 0.000000e+00 : f32
      %56 = vector.broadcast %cst_36 : f32 to vector<64x1xf32>
      %57 = arith.select %54, %55, %56 : vector<64x1xi1>, vector<64x1xf32>
      %58 = vector.shape_cast %57 : vector<64x1xf32> to vector<1x64x1xf32>
      %cst_37 = arith.constant dense<0.000000e+00> : vector<1xf32>
      %59 = vector.multi_reduction <add>, %58, %cst_37 [1, 2] : vector<1x64x1xf32> to vector<1xf32>
      %60 = vector.shape_cast %59 : vector<1xf32> to vector<1x1x1xf32>
      %61 = vector.extract %60[0, 0, 0] : f32 from vector<1x1x1xf32>
      %62 = vector.shape_cast %46 : vector<64x1xf32> to vector<1x64x1xf32>
      %cst_38 = arith.constant dense<0.000000e+00> : vector<1xf32>
      %63 = vector.multi_reduction <add>, %62, %cst_38 [1, 2] : vector<1x64x1xf32> to vector<1xf32>
      %64 = vector.shape_cast %63 : vector<1xf32> to vector<1x1x1xf32>
      %65 = vector.extract %64[0, 0, 0] : f32 from vector<1x1x1xf32>
      %66 = tpu.iota {dimensions = array<i32: 3>} : vector<1x1x8x128xi32>
      %c0_i32_39 = arith.constant 0 : i32
      %67 = vector.broadcast %c0_i32_39 : i32 to vector<1x1x8x128xi32>
      %68 = arith.cmpi eq, %66, %67 : vector<1x1x8x128xi32>
      %c1_i32 = arith.constant 1 : i32
      %69 = vector.broadcast %c1_i32 : i32 to vector<1x1x8x128xi32>
      %70 = arith.cmpi eq, %66, %69 : vector<1x1x8x128xi32>
      %cst_40 = arith.constant 0.000000e+00 : f32
      %71 = vector.broadcast %65 : f32 to vector<1x1x8x128xf32>
      %72 = vector.broadcast %cst_40 : f32 to vector<1x1x8x128xf32>
      %73 = arith.select %70, %71, %72 : vector<1x1x8x128xi1>, vector<1x1x8x128xf32>
      %74 = vector.broadcast %61 : f32 to vector<1x1x8x128xf32>
      %75 = arith.select %68, %74, %73 : vector<1x1x8x128xi1>, vector<1x1x8x128xf32>
      %c0_41 = arith.constant 0 : index
      %c0_42 = arith.constant 0 : index
      %c0_43 = arith.constant 0 : index
      %c0_44 = arith.constant 0 : index
      %76 = vector.load %arg7[%c0_41, %c0_42, %c0_43, %c0_44] : memref<1x1x8x128xf32, #tpu.memory_space<vmem>>, vector<1x1x8x128xf32>
      tpu.vector_store %arg7[%c0_41, %c0_42, %c0_43, %c0_44], %75 {strides = array<i32>} : memref<1x1x8x128xf32, #tpu.memory_space<vmem>>, vector<1x1x8x128xf32>,
    } else {
    }
    return
  }
  func.func @transform_0(%arg0: i32, %arg1: i32, %arg2: i32) -> (i32, i32, i32) {
    %c0_i32 = arith.constant 0 : i32
    %c0_i32_0 = arith.constant 0 : i32
    return %arg0, %arg1, %c0_i32 : i32, i32, i32
  }
  func.func @transform_1(%arg0: i32, %arg1: i32, %arg2: i32) -> (i32, i32) {
    %c0_i32 = arith.constant 0 : i32
    %c0_i32_0 = arith.constant 0 : i32
    return %c0_i32, %arg2 : i32, i32
  }
  func.func @transform_2(%arg0: i32, %arg1: i32, %arg2: i32) -> (i32, i32, i32) {
    %c0_i32 = arith.constant 0 : i32
    %c0_i32_0 = arith.constant 0 : i32
    return %arg0, %arg1, %c0_i32 : i32, i32, i32
  }
  func.func @transform_3(%arg0: i32, %arg1: i32, %arg2: i32) -> (i32, i32, i32) {
    %c0_i32 = arith.constant 0 : i32
    %c0_i32_0 = arith.constant 0 : i32
    return %arg0, %arg1, %c0_i32 : i32, i32, i32
  }
  func.func @transform_4(%arg0: i32, %arg1: i32, %arg2: i32) -> (i32, i32, i32, i32) {
    %c0_i32 = arith.constant 0 : i32
    %c0_i32_0 = arith.constant 0 : i32
    %c0_i32_1 = arith.constant 0 : i32
    return %arg0, %arg1, %c0_i32, %c0_i32_0 : i32, i32, i32, i32
  }
}

</mosaic_0001>

<llo_original>
// kernel: tpu_custom_call.1
$region0: #{tpu_custom_call.1}
  #allocation0 [shape = 'u32[]', space=smem, size = 0x4, offset = 0x4, fixed_abs, tag = 'smem constant byte address 0x4 - core index']
  #allocation1 [shape = 'u32[144,128]{1,0:T(1,128)}', space=vmem, size = 0x12000, scoped, tag = 'internal scratch']
  #allocation2 [shape = 'f32[64,1]{1,0:T(8,128)}', space=vmem, size = 0x8000, scoped, tag = 'scratch operand']
  #allocation3 [shape = 'f32[64,1]{1,0:T(8,128)}', space=vmem, size = 0x8000, scoped, tag = 'scratch operand']
  #allocation4 [shape = 'f32[64,1]{1,0:T(8,128)}', space=vmem, size = 0x8000, scoped, tag = 'scratch operand']
  %s0 = inlined_call_operand.vmem [shape: bf16[2,128,128], index: 0, kind: input, shape index: {}]
  %s1 = inlined_call_operand.vmem [shape: bf16[128,512], index: 1, kind: input, shape index: {}]
  %s2 = inlined_call_operand.vmem [shape: s32[2,128,1], index: 2, kind: input, shape index: {}]
  %s3 = inlined_call_operand.vmem [shape: f32[2,128,1], index: 3, kind: input, shape index: {}]
  %s4 = inlined_call_operand.hbm [shape: f32[2,2,8,128], index: 4, kind: output, shape index: {}]
  %s5 = sld [smem:[#allocation0]]
  $region98: #{tpu_custom_call.1} parent=0
    _
  %s7 = ssub.s32 1, %s5
  %s8 = scalar_select 0, %s7, %s5
  $region1: #{tpu_custom_call.1} parent=0
    #allocation5 [shape = 'u8[65536]{0}', space=vmem, size = 0x10000, scoped, tag = 'input window, operand 1']
    #allocation6 [shape = 'u8[8192]{0}', space=vmem, size = 0x2000, scoped, tag = 'output window, operand 0']
    #allocation7 [shape = 's32[2]{0}', space=sflag, size = 0x8, scoped, tag = 'scoped memory for tpu_custom_call.1']
    %9 = vsyncpa [#allocation7], 0
    %s10 = scalar_lea.sflag [#allocation7], 1
    %11 = vsyncpa %s10, 0
    loop: start=0, step=1, limit=18
    $region2: #{tpu_custom_call.1} parent=1 // loop_pre_header
      _
    $region3: #{tpu_custom_call.1} parent=1 // loop_header
      %s13 = sphi 0, %s17
      %p14 = scmp.ge.s32.totalorder %s13, 18
      %s20 = sphi 0, %s39
      %s21 = sphi 0, %s35
      %s22 = sphi 0, %s31
      %s23 = sphi 0, %s20
      %s24 = sphi 0, %s21
      %s25 = sphi 0, %s22
      %s26 = sphi 0, %s23
      %s27 = sphi 0, %s24
      %s28 = sphi 0, %s25
      %s44 = sphi 0, %s46
      %s47 = sphi 0, %s44
      %s48 = sphi 0, %s47
      %s64 = sphi 0, %s48
      %s70 = sphi 0, %s72
      %s73 = sphi 0, %s70
      %s74 = sphi 0, %s73
      %s90 = sphi 0, %s74
      %s98 = sphi 0, %s100
      %s101 = sphi 0, %s98
      %s102 = sphi 0, %s101
      %s118 = sphi 0, %s102
      %s126 = sphi 0, %s128
      %s129 = sphi 0, %s126
      %s130 = sphi 0, %s129
      %s146 = sphi 0, %s130
      %s154 = sphi 0, %s156
      %s157 = sphi 0, %s154
      %s158 = sphi 0, %s157
      %s174 = sphi 0, %s158
    $region4: #{tpu_custom_call.1} parent=1 // loop_header_branch
      %16 = sbr.rel (%p14) target = $region8
    $region5: #{tpu_custom_call.1} parent=1 // loop_body
      %s18 = ssub.s32 %s13, 1
      %s19 = ssub.s32 %s13, 2
      %s29 = sadd.s32 1, %s22
      %p30 = scmp.ge.s32.totalorder %s29, 4
      %s31 = scalar_select %p30, 0, %s29
      %s32 = sadd.s32 1, %s21
      %s33 = scalar_select %p30, %s32, %s21
      %p34 = scmp.ge.s32.totalorder %s33, 2
      %s35 = scalar_select %p34, 0, %s33
      %s36 = sadd.s32 1, %s20
      %s37 = scalar_select %p34, %s36, %s20
      %p38 = scmp.ge.s32.totalorder %s37, 2
      %s39 = scalar_select %p38, 0, %s37
      %s40 = ssub.s32 %s20, %s39
      %s41 = ssub.s32 %s21, %s35
      %s42 = sor.u32 %s40, %s41
      %p43 = scmp.eq.s32.totalorder %s42, 0
      %s45 = sadd.s32 %s44, 1
      %s46 = scalar_select %p43, %s44, %s45
      %p49 = pneg %p43
      %p50 = scmp.eq.s32.totalorder %s13, 15
      %p51 = por %p49, %p50
      %p52 = scmp.ne.s32.totalorder %s44, %s47
      %p53 = scmp.eq.s32.totalorder %s13, 0
      %p54 = por %p52, %p53
      %p55 = scmp.ne.s32.totalorder %s44, %s47
      %p56 = scmp.eq.s32.totalorder %s18, 15
      %p57 = por %p55, %p56
      %p58 = scmp.ne.s32.totalorder %s47, %s48
      %p59 = scmp.eq.s32.totalorder %s18, 0
      %p60 = por %p58, %p59
      %p61 = scmp.ne.s32.totalorder %s47, %s48
      %p62 = scmp.eq.s32.totalorder %s19, 15
      %p63 = por %p61, %p62
      %p65 = scmp.ne.s32.totalorder %s48, %s64
      %p66 = scmp.eq.s32.totalorder %s19, 0
      %p67 = por %p65, %p66
      %s68 = ssub.s32 %s22, %s31
      %p69 = scmp.eq.s32.totalorder %s68, 0
      %s71 = sadd.s32 %s70, 1
      %s72 = scalar_select %p69, %s70, %s71
      %p75 = pneg %p69
      %p76 = scmp.eq.s32.totalorder %s13, 15
      %p77 = por %p75, %p76
      %p78 = scmp.ne.s32.totalorder %s70, %s73
      %p79 = scmp.eq.s32.totalorder %s13, 0
      %p80 = por %p78, %p79
      %p81 = scmp.ne.s32.totalorder %s70, %s73
      %p82 = scmp.eq.s32.totalorder %s18, 15
      %p83 = por %p81, %p82
      %p84 = scmp.ne.s32.totalorder %s73, %s74
      %p85 = scmp.eq.s32.totalorder %s18, 0
      %p86 = por %p84, %p85
      %p87 = scmp.ne.s32.totalorder %s73, %s74
      %p88 = scmp.eq.s32.totalorder %s19, 15
      %p89 = por %p87, %p88
      %p91 = scmp.ne.s32.totalorder %s74, %s90
      %p92 = scmp.eq.s32.totalorder %s19, 0
      %p93 = por %p91, %p92
      %s94 = ssub.s32 %s20, %s39
      %s95 = ssub.s32 %s21, %s35
      %s96 = sor.u32 %s94, %s95
      %p97 = scmp.eq.s32.totalorder %s96, 0
      %s99 = sadd.s32 %s98, 1
      %s100 = scalar_select %p97, %s98, %s99
      %p103 = pneg %p97
      %p104 = scmp.eq.s32.totalorder %s13, 15
      %p105 = por %p103, %p104
      %p106 = scmp.ne.s32.totalorder %s98, %s101
      %p107 = scmp.eq.s32.totalorder %s13, 0
      %p108 = por %p106, %p107
      %p109 = scmp.ne.s32.totalorder %s98, %s101
      %p110 = scmp.eq.s32.totalorder %s18, 15
      %p111 = por %p109, %p110
      %p112 = scmp.ne.s32.totalorder %s101, %s102
      %p113 = scmp.eq.s32.totalorder %s18, 0
      %p114 = por %p112, %p113
      %p115 = scmp.ne.s32.totalorder %s101, %s102
      %p116 = scmp.eq.s32.totalorder %s19, 15
      %p117 = por %p115, %p116
      %p119 = scmp.ne.s32.totalorder %s102, %s118
      %p120 = scmp.eq.s32.totalorder %s19, 0
      %p121 = por %p119, %p120
      %s122 = ssub.s32 %s20, %s39
      %s123 = ssub.s32 %s21, %s35
      %s124 = sor.u32 %s122, %s123
      %p125 = scmp.eq.s32.totalorder %s124, 0
      %s127 = sadd.s32 %s126, 1
      %s128 = scalar_select %p125, %s126, %s127
      %p131 = pneg %p125
      %p132 = scmp.eq.s32.totalorder %s13, 15
      %p133 = por %p131, %p132
      %p134 = scmp.ne.s32.totalorder %s126, %s129
      %p135 = scmp.eq.s32.totalorder %s13, 0
      %p136 = por %p134, %p135
      %p137 = scmp.ne.s32.totalorder %s126, %s129
      %p138 = scmp.eq.s32.totalorder %s18, 15
      %p139 = por %p137, %p138
      %p140 = scmp.ne.s32.totalorder %s129, %s130
      %p141 = scmp.eq.s32.totalorder %s18, 0
      %p142 = por %p140, %p141
      %p143 = scmp.ne.s32.totalorder %s129, %s130
      %p144 = scmp.eq.s32.totalorder %s19, 15
      %p145 = por %p143, %p144
      %p147 = scmp.ne.s32.totalorder %s130, %s146
      %p148 = scmp.eq.s32.totalorder %s19, 0
      %p149 = por %p147, %p148
      %s150 = ssub.s32 %s20, %s39
      %s151 = ssub.s32 %s21, %s35
      %s152 = sor.u32 %s150, %s151
      %p153 = scmp.eq.s32.totalorder %s152, 0
      %s155 = sadd.s32 %s154, 1
      %s156 = scalar_select %p153, %s154, %s155
      %p159 = pneg %p153
      %p160 = scmp.eq.s32.totalorder %s13, 15
      %p161 = por %p159, %p160
      %p162 = scmp.ne.s32.totalorder %s154, %s157
      %p163 = scmp.eq.s32.totalorder %s13, 0
      %p164 = por %p162, %p163
      %p165 = scmp.ne.s32.totalorder %s154, %s157
      %p166 = scmp.eq.s32.totalorder %s18, 15
      %p167 = por %p165, %p166
      %p168 = scmp.ne.s32.totalorder %s157, %s158
      %p169 = scmp.eq.s32.totalorder %s18, 0
      %p170 = por %p168, %p169
      %p171 = scmp.ne.s32.totalorder %s157, %s158
      %p172 = scmp.eq.s32.totalorder %s19, 15
      %p173 = por %p171, %p172
      %p175 = scmp.ne.s32.totalorder %s158, %s174
      %p176 = scmp.eq.s32.totalorder %s19, 0
      %p177 = por %p175, %p176
      %p178 = scmp.le.s32.totalorder 1, %s13
      %p179 = scmp.lt.s32.totalorder %s13, 17
      %p180 = pnand %p178, %p179
      %p181 = pneg %p180
      // Predicated region
      $region9: #{tpu_custom_call.1} parent=5 // pred_check
        _
      $region10: #{tpu_custom_call.1} parent=5 // pred_check_branch
        %183 = sbr.rel (%p180) target = $region12
      $region11: #{tpu_custom_call.1} parent=5 // pred_region
        %s184 = ssub.s32 %s13, 1
      $region12: #{tpu_custom_call.1} parent=5 // pred_fallthru
        _
      %p185 = scmp.lt.s32.totalorder %s13, 16
      // Predicated region
      $region13: #{tpu_custom_call.1} parent=5 // pred_check
        %p186 = pneg %p185
      $region14: #{tpu_custom_call.1} parent=5 // pred_check_branch
        %188 = sbr.rel (%p186) target = $region16
      $region15: #{tpu_custom_call.1} parent=5 // pred_region
        // Predicated region
        $region17: #{tpu_custom_call.1} parent=15 // pred_check
          %p189 = pneg %p54
        $region18: #{tpu_custom_call.1} parent=15 // pred_check_branch
          %191 = sbr.rel (%p189) target = $region20
        $region19: #{tpu_custom_call.1} parent=15 // pred_region
          %s192 = smul.u32 8, %s21
          %p193 = scmp.lt.s32.totalorder %s20, 1
          %s194 = scalar_select %p193, %s20, 1
          %p195 = scmp.lt.s32.totalorder %s192, 15
          %s196 = scalar_select %p195, %s192, 15
          %s197 = smul.addr %s194, 16
          %s198 = sadd.s32 %s196, %s197
          %s199 = smul.addr %s198, 4
          %s200 = scalar_lea.vmem %s0, %s199
          %s201 = smul.u32 8, %s21
        $region20: #{tpu_custom_call.1} parent=15 // pred_fallthru
          _
        // Predicated region
        $region21: #{tpu_custom_call.1} parent=15 // pred_check
          %p202 = pneg %p80
        $region22: #{tpu_custom_call.1} parent=15 // pred_check_branch
          %204 = sbr.rel (%p202) target = $region24
        $region23: #{tpu_custom_call.1} parent=15 // pred_region
          %s205 = sand.u32 %s70, 1
          %s206 = sand.u32 %s70, 1
          %s207 = smul.addr %s206, 64
          %s208 = scalar_lea.vmem [#allocation5], %s207
          %s209 = smul.addr %s22, 4
          %s210 = scalar_lea.vmem %s1, %s209
          // Predicated region
          $region25: #{tpu_custom_call.1} parent=23 // pred_check
            _
          $region26: #{tpu_custom_call.1} parent=23 // pred_check_branch
            %212 = sbr.rel (0) target = $region28
          $region27: #{tpu_custom_call.1} parent=23 // pred_region
            // Predicated region
            $region29: #{tpu_custom_call.1} parent=27 // pred_check
              _
            $region30: #{tpu_custom_call.1} parent=27 // pred_check_branch
              %214 = sbr.rel target = $region32
            $region31: #{tpu_custom_call.1} parent=27 // pred_region
              // Predicated region
              $region44: #{tpu_custom_call.1} parent=31 // pred_check
                _
              $region45: #{tpu_custom_call.1} parent=31 // pred_check_branch
                %260 = sbr.rel (0) target = $region47
              $region46: #{tpu_custom_call.1} parent=31 // pred_region
                loop: start=0, step=1, limit=1
                $region48: #{tpu_custom_call.1} parent=46 // loop_pre_header
                  _
                $region49: #{tpu_custom_call.1} parent=46 // loop_header
                  %s262 = sphi 0, %s266
                  %p263 = scmp.ge.s32.totalorder %s262, 1
                  %s267 = sphi %s210, %s210
                  %s268 = sphi %s208, %s208
                $region50: #{tpu_custom_call.1} parent=46 // loop_header_branch
                  %265 = sbr.rel (%p263) target = $region54
                $region51: #{tpu_custom_call.1} parent=46 // loop_body
                  _
                $region52: #{tpu_custom_call.1} parent=46 // loop_footer
                  %s266 = sadd.s32 1, %s262
                $region53: #{tpu_custom_call.1} parent=46 // loop_footer_branch
                  %261 = sbr.rel target = $region49
                $region54: #{tpu_custom_call.1} parent=46 // loop_exit
                  _
                %s270 = ssub.s32 16, 1
                loop: start=0, step=1, limit=1
                $region55: #{tpu_custom_call.1} parent=46 // loop_pre_header
                  _
                $region56: #{tpu_custom_call.1} parent=46 // loop_header
                  %s272 = sphi 0, %s276
                  %p273 = scmp.ge.s32.totalorder %s272, 1
                  %s277 = sphi %s210, %s210
                  %s278 = sphi %s208, %s208
                $region57: #{tpu_custom_call.1} parent=46 // loop_header_branch
                  %275 = sbr.rel (%p273) target = $region61
                $region58: #{tpu_custom_call.1} parent=46 // loop_body
                  %v279 = vld [vmem:[%s277] sm:%s270]
                  %280 = vst [vmem:[%s278] sm:%s270] %v279
                  %v281 = vld [vmem:[%s277 + $0x10] sm:%s270]
                  %282 = vst [vmem:[%s278 + $0x4] sm:%s270] %v281
                  %v283 = vld [vmem:[%s277 + $0x20] sm:%s270]
                  %284 = vst [vmem:[%s278 + $0x8] sm:%s270] %v283
                  %v285 = vld [vmem:[%s277 + $0x30] sm:%s270]
                  %286 = vst [vmem:[%s278 + $0xc] sm:%s270] %v285
                  %v287 = vld [vmem:[%s277 + $0x40] sm:%s270]
                  %288 = vst [vmem:[%s278 + $0x10] sm:%s270] %v287
                  %v289 = vld [vmem:[%s277 + $0x50] sm:%s270]
                  %290 = vst [vmem:[%s278 + $0x14] sm:%s270] %v289
                  %v291 = vld [vmem:[%s277 + $0x60] sm:%s270]
                  %292 = vst [vmem:[%s278 + $0x18] sm:%s270] %v291
                  %v293 = vld [vmem:[%s277 + $0x70] sm:%s270]
                  %294 = vst [vmem:[%s278 + $0x1c] sm:%s270] %v293
                  %v295 = vld [vmem:[%s277 + $0x80] sm:%s270]
                  %296 = vst [vmem:[%s278 + $0x20] sm:%s270] %v295
                  %v297 = vld [vmem:[%s277 + $0x90] sm:%s270]
                  %298 = vst [vmem:[%s278 + $0x24] sm:%s270] %v297
                  %v299 = vld [vmem:[%s277 + $0xa0] sm:%s270]
                  %300 = vst [vmem:[%s278 + $0x28] sm:%s270] %v299
                  %v301 = vld [vmem:[%s277 + $0xb0] sm:%s270]
                  %302 = vst [vmem:[%s278 + $0x2c] sm:%s270] %v301
                  %v303 = vld [vmem:[%s277 + $0xc0] sm:%s270]
                  %304 = vst [vmem:[%s278 + $0x30] sm:%s270] %v303
                  %v305 = vld [vmem:[%s277 + $0xd0] sm:%s270]
                  %306 = vst [vmem:[%s278 + $0x34] sm:%s270] %v305
                  %v307 = vld [vmem:[%s277 + $0xe0] sm:%s270]
                  %308 = vst [vmem:[%s278 + $0x38] sm:%s270] %v307
                  %v309 = vld [vmem:[%s277 + $0xf0] sm:%s270]
                  %310 = vst [vmem:[%s278 + $0x3c] sm:%s270] %v309
                $region59: #{tpu_custom_call.1} parent=46 // loop_footer
                  %s276 = sadd.s32 1, %s272
                $region60: #{tpu_custom_call.1} parent=46 // loop_footer_branch
                  %271 = sbr.rel target = $region56
                $region61: #{tpu_custom_call.1} parent=46 // loop_exit
                  _
              $region47: #{tpu_custom_call.1} parent=31 // pred_fallthru
                _
            $region32: #{tpu_custom_call.1} parent=27 // pred_fallthru
              _
            // Predicated region
            $region33: #{tpu_custom_call.1} parent=27 // pred_check
              _
            $region34: #{tpu_custom_call.1} parent=27 // pred_check_branch
              %216 = sbr.rel (0) target = $region36
            $region35: #{tpu_custom_call.1} parent=27 // pred_region
              %s218 = ssub.s32 16, 1
              loop: start=0, step=1, limit=1
              $region37: #{tpu_custom_call.1} parent=35 // loop_pre_header
                _
              $region38: #{tpu_custom_call.1} parent=35 // loop_header
                %s220 = sphi 0, %s224
                %p221 = scmp.ge.s32.totalorder %s220, 1
                %s225 = sphi %s210, %s210
                %s226 = sphi %s208, %s208
              $region39: #{tpu_custom_call.1} parent=35 // loop_header_branch
                %223 = sbr.rel (%p221) target = $region43
              $region40: #{tpu_custom_call.1} parent=35 // loop_body
                %v227 = vld [vmem:[%s225] sm:%s218]
                %228 = vst [vmem:[%s226] sm:%s218] %v227
                %v229 = vld [vmem:[%s225 + $0x10] sm:%s218]
                %230 = vst [vmem:[%s226 + $0x4] sm:%s218] %v229
                %v231 = vld [vmem:[%s225 + $0x20] sm:%s218]
                %232 = vst [vmem:[%s226 + $0x8] sm:%s218] %v231
                %v233 = vld [vmem:[%s225 + $0x30] sm:%s218]
                %234 = vst [vmem:[%s226 + $0xc] sm:%s218] %v233
                %v235 = vld [vmem:[%s225 + $0x40] sm:%s218]
                %236 = vst [vmem:[%s226 + $0x10] sm:%s218] %v235
                %v237 = vld [vmem:[%s225 + $0x50] sm:%s218]
                %238 = vst [vmem:[%s226 + $0x14] sm:%s218] %v237
                %v239 = vld [vmem:[%s225 + $0x60] sm:%s218]
                %240 = vst [vmem:[%s226 + $0x18] sm:%s218] %v239
                %v241 = vld [vmem:[%s225 + $0x70] sm:%s218]
                %242 = vst [vmem:[%s226 + $0x1c] sm:%s218] %v241
                %v243 = vld [vmem:[%s225 + $0x80] sm:%s218]
                %244 = vst [vmem:[%s226 + $0x20] sm:%s218] %v243
                %v245 = vld [vmem:[%s225 + $0x90] sm:%s218]
                %246 = vst [vmem:[%s226 + $0x24] sm:%s218] %v245
                %v247 = vld [vmem:[%s225 + $0xa0] sm:%s218]
                %248 = vst [vmem:[%s226 + $0x28] sm:%s218] %v247
                %v249 = vld [vmem:[%s225 + $0xb0] sm:%s218]
                %250 = vst [vmem:[%s226 + $0x2c] sm:%s218] %v249
                %v251 = vld [vmem:[%s225 + $0xc0] sm:%s218]
                %252 = vst [vmem:[%s226 + $0x30] sm:%s218] %v251
                %v253 = vld [vmem:[%s225 + $0xd0] sm:%s218]
                %254 = vst [vmem:[%s226 + $0x34] sm:%s218] %v253
                %v255 = vld [vmem:[%s225 + $0xe0] sm:%s218]
                %256 = vst [vmem:[%s226 + $0x38] sm:%s218] %v255
                %v257 = vld [vmem:[%s225 + $0xf0] sm:%s218]
                %258 = vst [vmem:[%s226 + $0x3c] sm:%s218] %v257
              $region41: #{tpu_custom_call.1} parent=35 // loop_footer
                %s224 = sadd.s32 1, %s220
              $region42: #{tpu_custom_call.1} parent=35 // loop_footer_branch
                %219 = sbr.rel target = $region38
              $region43: #{tpu_custom_call.1} parent=35 // loop_exit
                _
            $region36: #{tpu_custom_call.1} parent=27 // pred_fallthru
              _
          $region28: #{tpu_custom_call.1} parent=23 // pred_fallthru
            _
          %311 = vnop
        $region24: #{tpu_custom_call.1} parent=15 // pred_fallthru
          _
        // Predicated region
        $region62: #{tpu_custom_call.1} parent=15 // pred_check
          %p312 = pneg %p108
        $region63: #{tpu_custom_call.1} parent=15 // pred_check_branch
          %314 = sbr.rel (%p312) target = $region65
        $region64: #{tpu_custom_call.1} parent=15 // pred_region
          %s315 = smul.u32 8, %s21
          %p316 = scmp.lt.s32.totalorder %s20, 1
          %s317 = scalar_select %p316, %s20, 1
          %p318 = scmp.lt.s32.totalorder %s315, 15
          %s319 = scalar_select %p318, %s315, 15
          %s320 = smul.addr %s317, 16
          %s321 = sadd.s32 %s319, %s320
          %s322 = smul.addr %s321, 8
          %s323 = scalar_lea.vmem %s2, %s322
          %s324 = smul.u32 8, %s21
        $region65: #{tpu_custom_call.1} parent=15 // pred_fallthru
          _
        // Predicated region
        $region66: #{tpu_custom_call.1} parent=15 // pred_check
          %p325 = pneg %p136
        $region67: #{tpu_custom_call.1} parent=15 // pred_check_branch
          %327 = sbr.rel (%p325) target = $region69
        $region68: #{tpu_custom_call.1} parent=15 // pred_region
          %s328 = smul.u32 8, %s21
          %p329 = scmp.lt.s32.totalorder %s20, 1
          %s330 = scalar_select %p329, %s20, 1
          %p331 = scmp.lt.s32.totalorder %s328, 15
          %s332 = scalar_select %p331, %s328, 15
          %s333 = smul.addr %s330, 16
          %s334 = sadd.s32 %s332, %s333
          %s335 = smul.addr %s334, 8
          %s336 = scalar_lea.vmem %s3, %s335
          %s337 = smul.u32 8, %s21
        $region69: #{tpu_custom_call.1} parent=15 // pred_fallthru
          _
      $region16: #{tpu_custom_call.1} parent=5 // pred_fallthru
        _
      %p338 = scmp.le.s32.totalorder 1, %s13
      %p339 = scmp.lt.s32.totalorder %s13, 17
      %p340 = pnand %p338, %p339
      %p341 = pneg %p340
      // Predicated region
      $region70: #{tpu_custom_call.1} parent=5 // pred_check
        _
      $region71: #{tpu_custom_call.1} parent=5 // pred_check_branch
        %343 = sbr.rel (%p340) target = $region73
      $region72: #{tpu_custom_call.1} parent=5 // pred_region
        %s344 = ssub.s32 %s13, 1
        %s345 = sand.u32 %s73, 1
        %s346 = sand.u32 %s73, 1
        %s347 = smul.addr %s346, 64
        %s348 = scalar_lea.vmem [#allocation5], %s347
        // Predicated region
        $region74: #{tpu_custom_call.1} parent=72 // pred_check
          %p349 = pneg %p86
        $region75: #{tpu_custom_call.1} parent=72 // pred_check_branch
          %351 = sbr.rel (%p349) target = $region77
        $region76: #{tpu_custom_call.1} parent=72 // pred_region
          _
        $region77: #{tpu_custom_call.1} parent=72 // pred_fallthru
          _
        %s352 = smul.u32 8, %s24
        %p353 = scmp.lt.s32.totalorder %s23, 1
        %s354 = scalar_select %p353, %s23, 1
        %p355 = scmp.lt.s32.totalorder %s352, 15
        %s356 = scalar_select %p355, %s352, 15
        %s357 = smul.addr %s354, 16
        %s358 = sadd.s32 %s356, %s357
        %s359 = smul.addr %s358, 4
        %s360 = scalar_lea.vmem %s0, %s359
        %p361 = pneg %p60
        %p362 = pneg %p57
        %s363 = sand.u32 %s73, 1
        %s364 = sand.u32 %s73, 1
        %s365 = smul.addr %s364, 64
        %s366 = scalar_lea.vmem [#allocation5], %s365
        %p367 = pneg %p86
        %p368 = pneg %p83
        %s369 = smul.u32 8, %s24
        %p370 = scmp.lt.s32.totalorder %s23, 1
        %s371 = scalar_select %p370, %s23, 1
        %p372 = scmp.lt.s32.totalorder %s369, 15
        %s373 = scalar_select %p372, %s369, 15
        %s374 = smul.addr %s371, 16
        %s375 = sadd.s32 %s373, %s374
        %s376 = smul.addr %s375, 8
        %s377 = scalar_lea.vmem %s2, %s376
        %p378 = pneg %p114
        %p379 = pneg %p111
        %s380 = smul.u32 8, %s24
        %p381 = scmp.lt.s32.totalorder %s23, 1
        %s382 = scalar_select %p381, %s23, 1
        %p383 = scmp.lt.s32.totalorder %s380, 15
        %s384 = scalar_select %p383, %s380, 15
        %s385 = smul.addr %s382, 16
        %s386 = sadd.s32 %s384, %s385
        %s387 = smul.addr %s386, 8
        %s388 = scalar_lea.vmem %s3, %s387
        %p389 = pneg %p142
        %p390 = pneg %p139
        %p391 = pneg %p170
        %p392 = pneg %p167
        %s393 = sand.u32 %s157, 1
        %s394 = scalar_lea.sflag [#allocation7], %s393
        %s395 = sand.u32 %s157, 1
        %s396 = smul.addr %s395, 8
        %s397 = scalar_lea.vmem [#allocation6], %s396
        %s398 = smul.u32 8, %s24
        %p399 = scmp.lt.s32.totalorder %s23, 1
        %s400 = scalar_select %p399, %s23, 1
        %p401 = scmp.lt.s32.totalorder %s398, 15
        %s402 = scalar_select %p401, %s398, 15
        %s403 = smul.addr %s400, 16
        %s404 = sadd.s32 %s402, %s403
        %s405 = smul.addr %s404, 4
        %s406 = scalar_lea.vmem %s0, %s405
        %s407 = smul.u32 8, %s24
        %s408 = smul.u32 8, %s24
        %p409 = scmp.lt.s32.totalorder %s23, 1
        %s410 = scalar_select %p409, %s23, 1
        %p411 = scmp.lt.s32.totalorder %s408, 15
        %s412 = scalar_select %p411, %s408, 15
        %s413 = smul.addr %s410, 16
        %s414 = sadd.s32 %s412, %s413
        %s415 = smul.addr %s414, 8
        %s416 = scalar_lea.vmem %s2, %s415
        %s417 = smul.u32 8, %s24
        %s418 = smul.u32 8, %s24
        %p419 = scmp.lt.s32.totalorder %s23, 1
        %s420 = scalar_select %p419, %s23, 1
        %p421 = scmp.lt.s32.totalorder %s418, 15
        %s422 = scalar_select %p421, %s418, 15
        %s423 = smul.addr %s420, 16
        %s424 = sadd.s32 %s422, %s423
        %s425 = smul.addr %s424, 8
        %s426 = scalar_lea.vmem %s3, %s425
        %s427 = smul.u32 8, %s24
        %p429 = scmp.eq.s32.totalorder %s25, 0
        // Predicated region
        $region78: #{tpu_custom_call.1} parent=72 // pred_check
          %p430 = pneg %p429
        $region79: #{tpu_custom_call.1} parent=72 // pred_check_branch
          %432 = sbr.rel (%p430) target = $region81
        $region80: #{tpu_custom_call.1} parent=72 // pred_region
          %vm433 = vcmask 7168
          %434 = vst.msk [vmem:[#allocation2] sm:$0xff] %vm433, -inf
          %435 = vst.msk [vmem:[#allocation2 + $0x8] sm:$0xff] %vm433, -inf
          %436 = vst.msk [vmem:[#allocation2 + $0x10] sm:$0xff] %vm433, -inf
          %437 = vst.msk [vmem:[#allocation2 + $0x18] sm:$0xff] %vm433, -inf
          %438 = vst.msk [vmem:[#allocation2 + $0x20] sm:$0xff] %vm433, -inf
          %439 = vst.msk [vmem:[#allocation2 + $0x28] sm:$0xff] %vm433, -inf
          %440 = vst.msk [vmem:[#allocation2 + $0x30] sm:$0xff] %vm433, -inf
          %441 = vst.msk [vmem:[#allocation2 + $0x38] sm:$0xff] %vm433, -inf
          %442 = vst.msk [vmem:[#allocation3] sm:$0xff] %vm433, 0.0
          %443 = vst.msk [vmem:[#allocation3 + $0x8] sm:$0xff] %vm433, 0.0
          %444 = vst.msk [vmem:[#allocation3 + $0x10] sm:$0xff] %vm433, 0.0
          %445 = vst.msk [vmem:[#allocation3 + $0x18] sm:$0xff] %vm433, 0.0
          %446 = vst.msk [vmem:[#allocation3 + $0x20] sm:$0xff] %vm433, 0.0
          %447 = vst.msk [vmem:[#allocation3 + $0x28] sm:$0xff] %vm433, 0.0
          %448 = vst.msk [vmem:[#allocation3 + $0x30] sm:$0xff] %vm433, 0.0
          %449 = vst.msk [vmem:[#allocation3 + $0x38] sm:$0xff] %vm433, 0.0
          %450 = vst.msk [vmem:[#allocation4] sm:$0xff] %vm433, 0.0
          %451 = vst.msk [vmem:[#allocation4 + $0x8] sm:$0xff] %vm433, 0.0
          %452 = vst.msk [vmem:[#allocation4 + $0x10] sm:$0xff] %vm433, 0.0
          %453 = vst.msk [vmem:[#allocation4 + $0x18] sm:$0xff] %vm433, 0.0
          %454 = vst.msk [vmem:[#allocation4 + $0x20] sm:$0xff] %vm433, 0.0
          %455 = vst.msk [vmem:[#allocation4 + $0x28] sm:$0xff] %vm433, 0.0
          %456 = vst.msk [vmem:[#allocation4 + $0x30] sm:$0xff] %vm433, 0.0
          %457 = vst.msk [vmem:[#allocation4 + $0x38] sm:$0xff] %vm433, 0.0
        $region81: #{tpu_custom_call.1} parent=72 // pred_fallthru
          _
        %v458 = vld [vmem:[%s406] sm:$0xf]
        %v459 = vld [vmem:[%s406 + $0x4] sm:$0xf]
        %v460 = vld [vmem:[%s406 + $0x8] sm:$0xf]
        %v461 = vld [vmem:[%s406 + $0xc] sm:$0xf]
        %v462 = vld [vmem:[%s406 + $0x10] sm:$0xf]
        %v463 = vld [vmem:[%s406 + $0x14] sm:$0xf]
        %v464 = vld [vmem:[%s406 + $0x18] sm:$0xf]
        %v465 = vld [vmem:[%s406 + $0x1c] sm:$0xf]
        %v466 = vld [vmem:[%s348] sm:$0xf]
        %v467 = vld [vmem:[%s348 + $0x4] sm:$0xf]
        %v468 = vld [vmem:[%s348 + $0x8] sm:$0xf]
        %v469 = vld [vmem:[%s348 + $0xc] sm:$0xf]
        %v470 = vld [vmem:[%s348 + $0x10] sm:$0xf]
        %v471 = vld [vmem:[%s348 + $0x14] sm:$0xf]
        %v472 = vld [vmem:[%s348 + $0x18] sm:$0xf]
        %v473 = vld [vmem:[%s348 + $0x1c] sm:$0xf]
        %v474 = vld [vmem:[%s348 + $0x20] sm:$0xf]
        %v475 = vld [vmem:[%s348 + $0x24] sm:$0xf]
        %v476 = vld [vmem:[%s348 + $0x28] sm:$0xf]
        %v477 = vld [vmem:[%s348 + $0x2c] sm:$0xf]
        %v478 = vld [vmem:[%s348 + $0x30] sm:$0xf]
        %v479 = vld [vmem:[%s348 + $0x34] sm:$0xf]
        %v480 = vld [vmem:[%s348 + $0x38] sm:$0xf]
        %v481 = vld [vmem:[%s348 + $0x3c] sm:$0xf]
        %v490 = vunpack.c.l.b16 %v458
        %v491 = vunpack.c.l.b16 %v459
        %v492 = vunpack.c.l.b16 %v460
        %v493 = vunpack.c.l.b16 %v461
        %v494 = vunpack.c.l.b16 %v462
        %v495 = vunpack.c.l.b16 %v463
        %v496 = vunpack.c.l.b16 %v464
        %v497 = vunpack.c.l.b16 %v465
        %v498 = vpack.c.b16 %v491, %v490
        %v499 = vpack.c.b16 %v493, %v492
        %v500 = vpack.c.b16 %v495, %v494
        %v501 = vpack.c.b16 %v497, %v496
        %v522 = vunpack.c.l.b16 %v466
        %v523 = vunpack.c.l.b16 %v467
        %v524 = vunpack.c.l.b16 %v468
        %v525 = vunpack.c.l.b16 %v469
        %v526 = vunpack.c.l.b16 %v470
        %v527 = vunpack.c.l.b16 %v471
        %v528 = vunpack.c.l.b16 %v472
        %v529 = vunpack.c.l.b16 %v473
        %v530 = vunpack.c.l.b16 %v474
        %v531 = vunpack.c.l.b16 %v475
        %v532 = vunpack.c.l.b16 %v476
        %v533 = vunpack.c.l.b16 %v477
        %v534 = vunpack.c.l.b16 %v478
        %v535 = vunpack.c.l.b16 %v479
        %v536 = vunpack.c.l.b16 %v480
        %v537 = vunpack.c.l.b16 %v481
        %v538 = vpack.c.b16 %v523, %v522
        %v539 = vpack.c.b16 %v525, %v524
        %v540 = vpack.c.b16 %v527, %v526
        %v541 = vpack.c.b16 %v529, %v528
        %v542 = vpack.c.b16 %v531, %v530
        %v543 = vpack.c.b16 %v533, %v532
        %v544 = vpack.c.b16 %v535, %v534
        %v545 = vpack.c.b16 %v537, %v536
        %554 = vmatprep.subr.bf16.mxu0 0
        %555 = vmatpush1.bf16.msra.mxu0 %v545
        %556 = vmatprep.subr.bf16.mxu0 0
        %557 = vmatpush1.bf16.msra.mxu0 %v544
        %558 = vmatprep.subr.bf16.mxu0 0
        %559 = vmatpush1.bf16.msra.mxu0 %v543
        %560 = vmatprep.subr.bf16.mxu0 0
        %561 = vmatpush1.bf16.msra.mxu0 %v542
        %562 = vmatprep.subr.bf16.mxu0 0
        %563 = vmatpush1.bf16.msra.mxu0 %v541
        %564 = vmatprep.subr.bf16.mxu0 0
        %565 = vmatpush1.bf16.msra.mxu0 %v540
        %566 = vmatprep.subr.bf16.mxu0 0
        %567 = vmatpush1.bf16.msra.mxu0 %v539
        %568 = vmatprep.subr.bf16.mxu0 0
        %569 = vmatpush1.bf16.msra.mxu0 %v538
        %570 = vmatprep.subr.bf16.mxu0 0
        %571 = vmatpush2.bf16.msra.mxu0 0
        %572 = vmatprep.subr.bf16.mxu0 0
        %573 = vmatpush2.bf16.msra.mxu0 0
        %574 = vmatprep.subr.bf16.mxu0 0
        %575 = vmatpush2.bf16.msra.mxu0 0
        %576 = vmatprep.subr.bf16.mxu0 0
        %577 = vmatpush2.bf16.msra.mxu0 0
        %578 = vmatprep.subr.bf16.mxu0 0
        %579 = vmatpush2.bf16.msra.mxu0 0
        %580 = vmatprep.subr.bf16.mxu0 0
        %581 = vmatpush2.bf16.msra.mxu0 0
        %582 = vmatprep.subr.bf16.mxu0 0
        %583 = vmatpush2.bf16.msra.mxu0 0
        %584 = vmatprep.subr.bf16.mxu0 0
        %585 = vmatpush2.bf16.msra.mxu0 0
        %586 = vmatprep.mubr.bf16.mxu0 0
        %587 = vmatmul.mubr.bf16.gmra.mxu0 %v498
        %v588 = vpop.f32.mrf.mxu0
        %v589 = vadd.f32 0.0, %v588
        %v590 = vpop.f32.mrf.mxu0
        %v591 = vpop.f32.mrf.mxu0
        %v592 = vadd.f32 0.0, %v591
        %v593 = vpop.f32.mrf.mxu0
        %594 = vmatprep.mubr.bf16.mxu0 0
        %595 = vmatmul.mubr.bf16.gmra.mxu0 %v499
        %v596 = vpop.f32.mrf.mxu0
        %v597 = vadd.f32 0.0, %v596
        %v598 = vpop.f32.mrf.mxu0
        %v599 = vpop.f32.mrf.mxu0
        %v600 = vadd.f32 0.0, %v599
        %v601 = vpop.f32.mrf.mxu0
        %602 = vmatprep.mubr.bf16.mxu0 0
        %603 = vmatmul.mubr.bf16.gmra.mxu0 %v500
        %v604 = vpop.f32.mrf.mxu0
        %v605 = vadd.f32 0.0, %v604
        %v606 = vpop.f32.mrf.mxu0
        %v607 = vpop.f32.mrf.mxu0
        %v608 = vadd.f32 0.0, %v607
        %v609 = vpop.f32.mrf.mxu0
        %610 = vmatprep.mubr.bf16.mxu0 0
        %611 = vmatmul.mubr.bf16.gmra.mxu0 %v501
        %v612 = vpop.f32.mrf.mxu0
        %v613 = vadd.f32 0.0, %v612
        %v614 = vpop.f32.mrf.mxu0
        %v615 = vpop.f32.mrf.mxu0
        %v616 = vadd.f32 0.0, %v615
        %v617 = vpop.f32.mrf.mxu0
        %618 = vdwg.mxu0
        %s619 = smul.u32 %s25, 128
        %v620 = vlaneseq
        %v621 = vand.u32 %v620, 127
        %v622 = vstv %s619
        %v623 = vadd.s32 %v622, %v621
        %vm624 = vcmp.lt.s32.totalorder %v623, 500
        %v625 = vsel %vm624, %v589, -1e+30
        %v626 = vsel %vm624, %v592, -1e+30
        %v627 = vsel %vm624, %v597, -1e+30
        %v628 = vsel %vm624, %v600, -1e+30
        %v629 = vsel %vm624, %v605, -1e+30
        %v630 = vsel %vm624, %v608, -1e+30
        %v631 = vsel %vm624, %v613, -1e+30
        %v632 = vsel %vm624, %v616, -1e+30
        %v633 = vld [vmem:[%s416] sm:$0xff]
        %v634 = vld [vmem:[%s416 + $0x8] sm:$0xff]
        %v635 = vld [vmem:[%s416 + $0x10] sm:$0xff]
        %v636 = vld [vmem:[%s416 + $0x18] sm:$0xff]
        %v637 = vld [vmem:[%s416 + $0x20] sm:$0xff]
        %v638 = vld [vmem:[%s416 + $0x28] sm:$0xff]
        %v639 = vld [vmem:[%s416 + $0x30] sm:$0xff]
        %v640 = vld [vmem:[%s416 + $0x38] sm:$0xff]
        %v641 = vld [vmem:[#allocation2] sm:$0xff]
        %v642 = vld [vmem:[#allocation2 + $0x8] sm:$0xff]
        %v643 = vld [vmem:[#allocation2 + $0x10] sm:$0xff]
        %v644 = vld [vmem:[#allocation2 + $0x18] sm:$0xff]
        %v645 = vld [vmem:[#allocation2 + $0x20] sm:$0xff]
        %v646 = vld [vmem:[#allocation2 + $0x28] sm:$0xff]
        %v647 = vld [vmem:[#allocation2 + $0x30] sm:$0xff]
        %v648 = vld [vmem:[#allocation2 + $0x38] sm:$0xff]
        %649 = vmax.xlane.f32.xlu0 %v625
        %v650 = vpop.xlane.xlu0 %649
        %651 = vmax.xlane.f32.xlu0 %v626
        %v652 = vpop.xlane.xlu0 %651
        %653 = vmax.xlane.f32.xlu0 %v627
        %v654 = vpop.xlane.xlu0 %653
        %655 = vmax.xlane.f32.xlu0 %v628
        %v656 = vpop.xlane.xlu0 %655
        %657 = vmax.xlane.f32.xlu0 %v629
        %v658 = vpop.xlane.xlu0 %657
        %659 = vmax.xlane.f32.xlu0 %v630
        %v660 = vpop.xlane.xlu0 %659
        %661 = vmax.xlane.f32.xlu0 %v631
        %v662 = vpop.xlane.xlu0 %661
        %663 = vmax.xlane.f32.xlu0 %v632
        %v664 = vpop.xlane.xlu0 %663
        %v665 = vmax.f32 %v641, %v650
        %v666 = vmax.f32 %v642, %v652
        %v667 = vmax.f32 %v643, %v654
        %v668 = vmax.f32 %v644, %v656
        %v669 = vmax.f32 %v645, %v658
        %v670 = vmax.f32 %v646, %v660
        %v671 = vmax.f32 %v647, %v662
        %v672 = vmax.f32 %v648, %v664
        %v673 = vld [vmem:[#allocation3] sm:$0xff]
        %v674 = vld [vmem:[#allocation3 + $0x8] sm:$0xff]
        %v675 = vld [vmem:[#allocation3 + $0x10] sm:$0xff]
        %v676 = vld [vmem:[#allocation3 + $0x18] sm:$0xff]
        %v677 = vld [vmem:[#allocation3 + $0x20] sm:$0xff]
        %v678 = vld [vmem:[#allocation3 + $0x28] sm:$0xff]
        %v679 = vld [vmem:[#allocation3 + $0x30] sm:$0xff]
        %v680 = vld [vmem:[#allocation3 + $0x38] sm:$0xff]
        %v681 = vsub.f32 %v641, %v665
        %v682 = vsub.f32 %v642, %v666
        %v683 = vsub.f32 %v643, %v667
        %v684 = vsub.f32 %v644, %v668
        %v685 = vsub.f32 %v645, %v669
        %v686 = vsub.f32 %v646, %v670
        %v687 = vsub.f32 %v647, %v671
        %v688 = vsub.f32 %v648, %v672
        %v689 = vmul.f32 %v681, 1.442695
        %v690 = vpow.pop %v689
        %v691 = vmul.f32 %v682, 1.442695
        %v692 = vpow.pop %v691
        %v693 = vmul.f32 %v683, 1.442695
        %v694 = vpow.pop %v693
        %v695 = vmul.f32 %v684, 1.442695
        %v696 = vpow.pop %v695
        %v697 = vmul.f32 %v685, 1.442695
        %v698 = vpow.pop %v697
        %v699 = vmul.f32 %v686, 1.442695
        %v700 = vpow.pop %v699
        %v701 = vmul.f32 %v687, 1.442695
        %v702 = vpow.pop %v701
        %v703 = vmul.f32 %v688, 1.442695
        %v704 = vpow.pop %v703
        %v705 = vmul.f32 %v673, %v690
        %v706 = vmul.f32 %v674, %v692
        %v707 = vmul.f32 %v675, %v694
        %v708 = vmul.f32 %v676, %v696
        %v709 = vmul.f32 %v677, %v698
        %v710 = vmul.f32 %v678, %v700
        %v711 = vmul.f32 %v679, %v702
        %v712 = vmul.f32 %v680, %v704
        %714 = vset.pattern.permute.xlu0 0
        %715 = vperm.xlu0 %714, %v665
        %v716 = vpop.permute.xlu0 %715
        %719 = vset.pattern.permute.xlu0 0
        %720 = vperm.xlu0 %719, %v666
        %v721 = vpop.permute.xlu0 %720
        %724 = vset.pattern.permute.xlu0 0
        %725 = vperm.xlu0 %724, %v667
        %v726 = vpop.permute.xlu0 %725
        %729 = vset.pattern.permute.xlu0 0
        %730 = vperm.xlu0 %729, %v668
        %v731 = vpop.permute.xlu0 %730
        %734 = vset.pattern.permute.xlu0 0
        %735 = vperm.xlu0 %734, %v669
        %v736 = vpop.permute.xlu0 %735
        %739 = vset.pattern.permute.xlu0 0
        %740 = vperm.xlu0 %739, %v670
        %v741 = vpop.permute.xlu0 %740
        %744 = vset.pattern.permute.xlu0 0
        %745 = vperm.xlu0 %744, %v671
        %v746 = vpop.permute.xlu0 %745
        %749 = vset.pattern.permute.xlu0 0
        %750 = vperm.xlu0 %749, %v672
        %v751 = vpop.permute.xlu0 %750
        %v753 = vsub.f32 %v625, %v716
        %v754 = vsub.f32 %v626, %v721
        %v755 = vsub.f32 %v627, %v726
        %v756 = vsub.f32 %v628, %v731
        %v757 = vsub.f32 %v629, %v736
        %v758 = vsub.f32 %v630, %v741
        %v759 = vsub.f32 %v631, %v746
        %v760 = vsub.f32 %v632, %v751
        %v761 = vmul.f32 %v753, 1.442695
        %v762 = vpow.pop %v761
        %v763 = vmul.f32 %v754, 1.442695
        %v764 = vpow.pop %v763
        %v765 = vmul.f32 %v755, 1.442695
        %v766 = vpow.pop %v765
        %v767 = vmul.f32 %v756, 1.442695
        %v768 = vpow.pop %v767
        %v769 = vmul.f32 %v757, 1.442695
        %v770 = vpow.pop %v769
        %v771 = vmul.f32 %v758, 1.442695
        %v772 = vpow.pop %v771
        %v773 = vmul.f32 %v759, 1.442695
        %v774 = vpow.pop %v773
        %v775 = vmul.f32 %v760, 1.442695
        %v776 = vpow.pop %v775
        %777 = vadd.xlane.f32.xlu0 %v762
        %v778 = vpop.xlane.xlu0 %777
        %779 = vadd.xlane.f32.xlu0 %v764
        %v780 = vpop.xlane.xlu0 %779
        %781 = vadd.xlane.f32.xlu0 %v766
        %v782 = vpop.xlane.xlu0 %781
        %783 = vadd.xlane.f32.xlu0 %v768
        %v784 = vpop.xlane.xlu0 %783
        %785 = vadd.xlane.f32.xlu0 %v770
        %v786 = vpop.xlane.xlu0 %785
        %787 = vadd.xlane.f32.xlu0 %v772
        %v788 = vpop.xlane.xlu0 %787
        %789 = vadd.xlane.f32.xlu0 %v774
        %v790 = vpop.xlane.xlu0 %789
        %791 = vadd.xlane.f32.xlu0 %v776
        %v792 = vpop.xlane.xlu0 %791
        %v793 = vadd.f32 %v705, %v778
        %v794 = vadd.f32 %v706, %v780
        %v795 = vadd.f32 %v707, %v782
        %v796 = vadd.f32 %v708, %v784
        %v797 = vadd.f32 %v709, %v786
        %v798 = vadd.f32 %v710, %v788
        %v799 = vadd.f32 %v711, %v790
        %v800 = vadd.f32 %v712, %v792
        %vm801 = vcmask 7168
        %802 = vst.msk [vmem:[#allocation3] sm:$0xff] %vm801, %v793
        %803 = vst.msk [vmem:[#allocation3 + $0x8] sm:$0xff] %vm801, %v794
        %804 = vst.msk [vmem:[#allocation3 + $0x10] sm:$0xff] %vm801, %v795
        %805 = vst.msk [vmem:[#allocation3 + $0x18] sm:$0xff] %vm801, %v796
        %806 = vst.msk [vmem:[#allocation3 + $0x20] sm:$0xff] %vm801, %v797
        %807 = vst.msk [vmem:[#allocation3 + $0x28] sm:$0xff] %vm801, %v798
        %808 = vst.msk [vmem:[#allocation3 + $0x30] sm:$0xff] %vm801, %v799
        %809 = vst.msk [vmem:[#allocation3 + $0x38] sm:$0xff] %vm801, %v800
        %v810 = vld [vmem:[#allocation4] sm:$0xff]
        %v811 = vld [vmem:[#allocation4 + $0x8] sm:$0xff]
        %v812 = vld [vmem:[#allocation4 + $0x10] sm:$0xff]
        %v813 = vld [vmem:[#allocation4 + $0x18] sm:$0xff]
        %v814 = vld [vmem:[#allocation4 + $0x20] sm:$0xff]
        %v815 = vld [vmem:[#allocation4 + $0x28] sm:$0xff]
        %v816 = vld [vmem:[#allocation4 + $0x30] sm:$0xff]
        %v817 = vld [vmem:[#allocation4 + $0x38] sm:$0xff]
        %818 = vset.pattern.permute.xlu0 0
        %819 = vperm.xlu0 %818, %v633
        %v820 = vpop.permute.xlu0 %819
        %821 = vset.pattern.permute.xlu0 0
        %822 = vperm.xlu0 %821, %v634
        %v823 = vpop.permute.xlu0 %822
        %824 = vset.pattern.permute.xlu0 0
        %825 = vperm.xlu0 %824, %v635
        %v826 = vpop.permute.xlu0 %825
        %827 = vset.pattern.permute.xlu0 0
        %828 = vperm.xlu0 %827, %v636
        %v829 = vpop.permute.xlu0 %828
        %830 = vset.pattern.permute.xlu0 0
        %831 = vperm.xlu0 %830, %v637
        %v832 = vpop.permute.xlu0 %831
        %833 = vset.pattern.permute.xlu0 0
        %834 = vperm.xlu0 %833, %v638
        %v835 = vpop.permute.xlu0 %834
        %836 = vset.pattern.permute.xlu0 0
        %837 = vperm.xlu0 %836, %v639
        %v838 = vpop.permute.xlu0 %837
        %839 = vset.pattern.permute.xlu0 0
        %840 = vperm.xlu0 %839, %v640
        %v841 = vpop.permute.xlu0 %840
        %vm842 = vcmp.eq.s32.totalorder %v623, %v820
        %vm843 = vcmp.eq.s32.totalorder %v623, %v823
        %vm844 = vcmp.eq.s32.totalorder %v623, %v826
        %vm845 = vcmp.eq.s32.totalorder %v623, %v829
        %vm846 = vcmp.eq.s32.totalorder %v623, %v832
        %vm847 = vcmp.eq.s32.totalorder %v623, %v835
        %vm848 = vcmp.eq.s32.totalorder %v623, %v838
        %vm849 = vcmp.eq.s32.totalorder %v623, %v841
        %v850 = vsel %vm842, %v625, 0.0
        %v851 = vsel %vm843, %v626, 0.0
        %v852 = vsel %vm844, %v627, 0.0
        %v853 = vsel %vm845, %v628, 0.0
        %v854 = vsel %vm846, %v629, 0.0
        %v855 = vsel %vm847, %v630, 0.0
        %v856 = vsel %vm848, %v631, 0.0
        %v857 = vsel %vm849, %v632, 0.0
        %858 = vadd.xlane.f32.xlu0 %v850
        %v859 = vpop.xlane.xlu0 %858
        %860 = vadd.xlane.f32.xlu0 %v851
        %v861 = vpop.xlane.xlu0 %860
        %862 = vadd.xlane.f32.xlu0 %v852
        %v863 = vpop.xlane.xlu0 %862
        %864 = vadd.xlane.f32.xlu0 %v853
        %v865 = vpop.xlane.xlu0 %864
        %866 = vadd.xlane.f32.xlu0 %v854
        %v867 = vpop.xlane.xlu0 %866
        %868 = vadd.xlane.f32.xlu0 %v855
        %v869 = vpop.xlane.xlu0 %868
        %870 = vadd.xlane.f32.xlu0 %v856
        %v871 = vpop.xlane.xlu0 %870
        %872 = vadd.xlane.f32.xlu0 %v857
        %v873 = vpop.xlane.xlu0 %872
        %v874 = vadd.f32 %v810, %v859
        %v875 = vadd.f32 %v811, %v861
        %v876 = vadd.f32 %v812, %v863
        %v877 = vadd.f32 %v813, %v865
        %v878 = vadd.f32 %v814, %v867
        %v879 = vadd.f32 %v815, %v869
        %v880 = vadd.f32 %v816, %v871
        %v881 = vadd.f32 %v817, %v873
        %882 = vst.msk [vmem:[#allocation4] sm:$0xff] %vm801, %v874
        %883 = vst.msk [vmem:[#allocation4 + $0x8] sm:$0xff] %vm801, %v875
        %884 = vst.msk [vmem:[#allocation4 + $0x10] sm:$0xff] %vm801, %v876
        %885 = vst.msk [vmem:[#allocation4 + $0x18] sm:$0xff] %vm801, %v877
        %886 = vst.msk [vmem:[#allocation4 + $0x20] sm:$0xff] %vm801, %v878
        %887 = vst.msk [vmem:[#allocation4 + $0x28] sm:$0xff] %vm801, %v879
        %888 = vst.msk [vmem:[#allocation4 + $0x30] sm:$0xff] %vm801, %v880
        %889 = vst.msk [vmem:[#allocation4 + $0x38] sm:$0xff] %vm801, %v881
        %890 = vst.msk [vmem:[#allocation2] sm:$0xff] %vm801, %v665
        %891 = vst.msk [vmem:[#allocation2 + $0x8] sm:$0xff] %vm801, %v666
        %892 = vst.msk [vmem:[#allocation2 + $0x10] sm:$0xff] %vm801, %v667
        %893 = vst.msk [vmem:[#allocation2 + $0x18] sm:$0xff] %vm801, %v668
        %894 = vst.msk [vmem:[#allocation2 + $0x20] sm:$0xff] %vm801, %v669
        %895 = vst.msk [vmem:[#allocation2 + $0x28] sm:$0xff] %vm801, %v670
        %896 = vst.msk [vmem:[#allocation2 + $0x30] sm:$0xff] %vm801, %v671
        %897 = vst.msk [vmem:[#allocation2 + $0x38] sm:$0xff] %vm801, %v672
        %p898 = scmp.eq.s32.totalorder %s25, 3
        // Predicated region
        $region82: #{tpu_custom_call.1} parent=72 // pred_check
          %p899 = pneg %p898
        $region83: #{tpu_custom_call.1} parent=72 // pred_check_branch
          %901 = sbr.rel (%p899) target = $region85
        $region84: #{tpu_custom_call.1} parent=72 // pred_region
          %v902 = vld [vmem:[%s426] sm:$0xff]
          %v903 = vld [vmem:[%s426 + $0x8] sm:$0xff]
          %v904 = vld [vmem:[%s426 + $0x10] sm:$0xff]
          %v905 = vld [vmem:[%s426 + $0x18] sm:$0xff]
          %v906 = vld [vmem:[%s426 + $0x20] sm:$0xff]
          %v907 = vld [vmem:[%s426 + $0x28] sm:$0xff]
          %v908 = vld [vmem:[%s426 + $0x30] sm:$0xff]
          %v909 = vld [vmem:[%s426 + $0x38] sm:$0xff]
          %v910 = vld [vmem:[#allocation2] sm:$0xff]
          %v911 = vld [vmem:[#allocation2 + $0x8] sm:$0xff]
          %v912 = vld [vmem:[#allocation2 + $0x10] sm:$0xff]
          %v913 = vld [vmem:[#allocation2 + $0x18] sm:$0xff]
          %v914 = vld [vmem:[#allocation2 + $0x20] sm:$0xff]
          %v915 = vld [vmem:[#allocation2 + $0x28] sm:$0xff]
          %v916 = vld [vmem:[#allocation2 + $0x30] sm:$0xff]
          %v917 = vld [vmem:[#allocation2 + $0x38] sm:$0xff]
          %v918 = vld [vmem:[#allocation3] sm:$0xff]
          %v919 = vld [vmem:[#allocation3 + $0x8] sm:$0xff]
          %v920 = vld [vmem:[#allocation3 + $0x10] sm:$0xff]
          %v921 = vld [vmem:[#allocation3 + $0x18] sm:$0xff]
          %v922 = vld [vmem:[#allocation3 + $0x20] sm:$0xff]
          %v923 = vld [vmem:[#allocation3 + $0x28] sm:$0xff]
          %v924 = vld [vmem:[#allocation3 + $0x30] sm:$0xff]
          %v925 = vld [vmem:[#allocation3 + $0x38] sm:$0xff]
          %v926 = vlog2.pop %v918
          %v927 = vmul.f32 %v926, 0.6931472
          %v928 = vlog2.pop %v919
          %v929 = vmul.f32 %v928, 0.6931472
          %v930 = vlog2.pop %v920
          %v931 = vmul.f32 %v930, 0.6931472
          %v932 = vlog2.pop %v921
          %v933 = vmul.f32 %v932, 0.6931472
          %v934 = vlog2.pop %v922
          %v935 = vmul.f32 %v934, 0.6931472
          %v936 = vlog2.pop %v923
          %v937 = vmul.f32 %v936, 0.6931472
          %v938 = vlog2.pop %v924
          %v939 = vmul.f32 %v938, 0.6931472
          %v940 = vlog2.pop %v925
          %v941 = vmul.f32 %v940, 0.6931472
          %v942 = vadd.f32 %v910, %v927
          %v943 = vadd.f32 %v911, %v929
          %v944 = vadd.f32 %v912, %v931
          %v945 = vadd.f32 %v913, %v933
          %v946 = vadd.f32 %v914, %v935
          %v947 = vadd.f32 %v915, %v937
          %v948 = vadd.f32 %v916, %v939
          %v949 = vadd.f32 %v917, %v941
          %v950 = vld [vmem:[#allocation4] sm:$0xff]
          %v951 = vld [vmem:[#allocation4 + $0x8] sm:$0xff]
          %v952 = vld [vmem:[#allocation4 + $0x10] sm:$0xff]
          %v953 = vld [vmem:[#allocation4 + $0x18] sm:$0xff]
          %v954 = vld [vmem:[#allocation4 + $0x20] sm:$0xff]
          %v955 = vld [vmem:[#allocation4 + $0x28] sm:$0xff]
          %v956 = vld [vmem:[#allocation4 + $0x30] sm:$0xff]
          %v957 = vld [vmem:[#allocation4 + $0x38] sm:$0xff]
          %v958 = vsub.f32 %v942, %v950
          %v959 = vsub.f32 %v943, %v951
          %v960 = vsub.f32 %v944, %v952
          %v961 = vsub.f32 %v945, %v953
          %v962 = vsub.f32 %v946, %v954
          %v963 = vsub.f32 %v947, %v955
          %v964 = vsub.f32 %v948, %v956
          %v965 = vsub.f32 %v949, %v957
          %vm966 = vcmp.ne.f32.partialorder %v902, 0.0
          %vm967 = vcmp.ne.f32.partialorder %v903, 0.0
          %vm968 = vcmp.ne.f32.partialorder %v904, 0.0
          %vm969 = vcmp.ne.f32.partialorder %v905, 0.0
          %vm970 = vcmp.ne.f32.partialorder %v906, 0.0
          %vm971 = vcmp.ne.f32.partialorder %v907, 0.0
          %vm972 = vcmp.ne.f32.partialorder %v908, 0.0
          %vm973 = vcmp.ne.f32.partialorder %v909, 0.0
          %v974 = vmul.f32 %v958, %v902
          %v975 = vmul.f32 %v959, %v903
          %v976 = vmul.f32 %v960, %v904
          %v977 = vmul.f32 %v961, %v905
          %v978 = vmul.f32 %v962, %v906
          %v979 = vmul.f32 %v963, %v907
          %v980 = vmul.f32 %v964, %v908
          %v981 = vmul.f32 %v965, %v909
          %v982 = vsel %vm966, %v974, 0.0
          %v983 = vsel %vm967, %v975, 0.0
          %v984 = vsel %vm968, %v976, 0.0
          %v985 = vsel %vm969, %v977, 0.0
          %v986 = vsel %vm970, %v978, 0.0
          %v987 = vsel %vm971, %v979, 0.0
          %v988 = vsel %vm972, %v980, 0.0
          %v989 = vsel %vm973, %v981, 0.0
          %v990 = vsel %vm801, %v982, 0.0
          %v991 = vsel %vm801, %v983, 0.0
          %v992 = vadd.f32 %v990, %v991
          %v993 = vsel %vm801, %v984, 0.0
          %v994 = vadd.f32 %v992, %v993
          %v995 = vsel %vm801, %v985, 0.0
          %v996 = vadd.f32 %v994, %v995
          %v997 = vsel %vm801, %v986, 0.0
          %v998 = vadd.f32 %v996, %v997
          %v999 = vsel %vm801, %v987, 0.0
          %v1000 = vadd.f32 %v998, %v999
          %v1001 = vsel %vm801, %v988, 0.0
          %v1002 = vadd.f32 %v1000, %v1001
          %v1003 = vsel %vm801, %v989, 0.0
          %v1004 = vadd.f32 %v1002, %v1003
          %1005 = vadd.xlane.f32.xlu0 %v1004
          %v1006 = vpop.xlane.xlu0 %1005
          %v1007 = vrot.slane %v1006, 4
          %v1008 = vadd.f32 %v1006, %v1007
          %v1009 = vrot.slane %v1008, 2
          %v1010 = vadd.f32 %v1008, %v1009
          %v1011 = vrot.slane %v1010, 1
          %v1012 = vadd.f32 %v1010, %v1011
          %s1013 = vtos %v1012
          %v1014 = vsel %vm801, %v902, 0.0
          %v1015 = vsel %vm801, %v903, 0.0
          %v1016 = vadd.f32 %v1014, %v1015
          %v1017 = vsel %vm801, %v904, 0.0
          %v1018 = vadd.f32 %v1016, %v1017
          %v1019 = vsel %vm801, %v905, 0.0
          %v1020 = vadd.f32 %v1018, %v1019
          %v1021 = vsel %vm801, %v906, 0.0
          %v1022 = vadd.f32 %v1020, %v1021
          %v1023 = vsel %vm801, %v907, 0.0
          %v1024 = vadd.f32 %v1022, %v1023
          %v1025 = vsel %vm801, %v908, 0.0
          %v1026 = vadd.f32 %v1024, %v1025
          %v1027 = vsel %vm801, %v909, 0.0
          %v1028 = vadd.f32 %v1026, %v1027
          %1029 = vadd.xlane.f32.xlu0 %v1028
          %v1030 = vpop.xlane.xlu0 %1029
          %v1031 = vrot.slane %v1030, 4
          %v1032 = vadd.f32 %v1030, %v1031
          %v1033 = vrot.slane %v1032, 2
          %v1034 = vadd.f32 %v1032, %v1033
          %v1035 = vrot.slane %v1034, 1
          %v1036 = vadd.f32 %v1034, %v1035
          %s1037 = vtos %v1036
          %vm1038 = vcmp.eq.s32.totalorder %v621, 0
          %vm1039 = vcmp.eq.s32.totalorder %v621, 1
          %v1040 = vstv %s1037
          %v1041 = vsel %vm1039, %v1040, 0.0
          %v1042 = vstv %s1013
          %v1043 = vsel %vm1038, %v1042, %v1041
          %1044 = vst [vmem:[%s397] sm:$0xff] %v1043
        $region85: #{tpu_custom_call.1} parent=72 // pred_fallthru
          _
        %s1045 = sand.u32 %s157, 1
        %s1046 = scalar_lea.sflag [#allocation7], %s1045
        %s1047 = sand.u32 %s157, 1
        %s1048 = smul.addr %s1047, 8
        %s1049 = scalar_lea.vmem [#allocation6], %s1048
        // Predicated region
        $region86: #{tpu_custom_call.1} parent=72 // pred_check
          %p1050 = pneg %p167
        $region87: #{tpu_custom_call.1} parent=72 // pred_check_branch
          %1052 = sbr.rel (%p1050) target = $region89
        $region88: #{tpu_custom_call.1} parent=72 // pred_region
          %s1054 = ssub.s32 128, 128
          %1055 = vsyncadd %s1046, %s1054
          %s1056 = smul.addr %s23, 2
          %s1057 = sadd.s32 %s24, %s1056
          %s1058 = smul.addr %s1057, 128
          %s1059 = scalar_lea.hbm %s4, %s1058
          %s1061 = sshll.u32 %s1049, 4
          %s1062 = int_to_ptr.vmem [resolvable:$true] %s1061
          %1064 = dma.vmem_to_hbm [thread:$0]  %s1062, 128, %s1059, %s1046
        $region89: #{tpu_custom_call.1} parent=72 // pred_fallthru
          _
      $region73: #{tpu_custom_call.1} parent=5 // pred_fallthru
        _
      %p1065 = scmp.le.s32.totalorder 2, %s13
      // Predicated region
      $region90: #{tpu_custom_call.1} parent=5 // pred_check
        %p1066 = pneg %p1065
      $region91: #{tpu_custom_call.1} parent=5 // pred_check_branch
        %1068 = sbr.rel (%p1066) target = $region93
      $region92: #{tpu_custom_call.1} parent=5 // pred_region
        %s1069 = ssub.s32 %s13, 2
        // Predicated region
        $region94: #{tpu_custom_call.1} parent=92 // pred_check
          %p1070 = pneg %p173
        $region95: #{tpu_custom_call.1} parent=92 // pred_check_branch
          %1072 = sbr.rel (%p1070) target = $region97
        $region96: #{tpu_custom_call.1} parent=92 // pred_region
          %s1073 = sand.u32 %s158, 1
          %s1074 = scalar_lea.sflag [#allocation7], %s1073
          %s1075 = sand.u32 %s158, 1
          %s1076 = smul.addr %s1075, 8
          %s1077 = scalar_lea.vmem [#allocation6], %s1076
          %1078 = dma.done %s1074, 128
        $region97: #{tpu_custom_call.1} parent=92 // pred_fallthru
          _
      $region93: #{tpu_custom_call.1} parent=5 // pred_fallthru
        _
    $region6: #{tpu_custom_call.1} parent=1 // loop_footer
      %s17 = sadd.s32 1, %s13
    $region7: #{tpu_custom_call.1} parent=1 // loop_footer_branch
      %12 = sbr.rel target = $region3
    $region8: #{tpu_custom_call.1} parent=1 // loop_exit
      _
    %1079 = vsyncpa [#allocation7], 1
    %s1080 = scalar_lea.sflag [#allocation7], 1
    %1081 = vsyncpa %s1080, 1

</llo_original>
